<compile_context>
chip_gen: v7x
topology: tpu7x:2x2x1
jax: 0.10.0
libtpu: 0.0.40
codegen_flags: <defaults>
</compile_context>

<pallas_src>
import functools

import jax
import jax.numpy as jnp
from jax.experimental import pallas as pl
from jax.experimental.pallas import tpu as pltpu


_VMEM_LIMIT_BYTES = 48 * 1024 * 1024     # above 32 MiB default, below v7x 64 MiB
_FUSED_VMEM_BUDGET = 40 * 1024 * 1024    # conservative "does the fused kernel fit"


def _round_up(x, m):
    return (x + m - 1) // m * m


# ----------------------------------------------------------------------------
# Fused small-graph kernel: both layers in one pallas_call, H stays in VMEM.
# ----------------------------------------------------------------------------
def _fused_gcn_kernel(s_ref, w1_ref, w2_ref, out_ref, *, num_support, np_):
    # Layer 1 (featureless): H = relu(S_cat @ W1_cat)  -- one folded contraction.
    h = jnp.dot(s_ref[...], w1_ref[...], preferred_element_type=jnp.float32)
    h = jnp.maximum(h, 0.0)                                   # (NP, Hp)

    # Layer 2: out = sum_i S_i @ (H @ W2_i)   (K is small; static unroll)
    acc = jnp.zeros(out_ref.shape, dtype=jnp.float32)
    for i in range(num_support):
        pre = jnp.dot(h, w2_ref[i], preferred_element_type=jnp.float32)   # (NP, Cp)
        s_i = s_ref[:, i * np_:(i + 1) * np_]                 # 128-aligned slice
        acc = acc + jnp.dot(s_i, pre, preferred_element_type=jnp.float32)
    out_ref[...] = acc


def _gcn_fused(s_cat, w1_cat, w2_pad, NP, K, Hp, Cp):
    kernel = functools.partial(_fused_gcn_kernel, num_support=K, np_=NP)
    return pl.pallas_call(
        kernel,
        out_shape=jax.ShapeDtypeStruct((NP, Cp), jnp.float32),
        grid_spec=pltpu.PrefetchScalarGridSpec(
            num_scalar_prefetch=0,
            grid=(1,),
            in_specs=[
                pl.BlockSpec((NP, K * NP), lambda i: (0, 0)),
                pl.BlockSpec((K * NP, Hp), lambda i: (0, 0)),
                pl.BlockSpec((K, Hp, Cp), lambda i: (0, 0, 0)),
            ],
            out_specs=pl.BlockSpec((NP, Cp), lambda i: (0, 0)),
        ),
        compiler_params=pltpu.CompilerParams(
            dimension_semantics=("arbitrary",),
            vmem_limit_bytes=_VMEM_LIMIT_BYTES,
        ),
    )(s_cat, w1_cat, w2_pad)


def _fused_vmem_bytes(NP, K, Hp, Cp):
    f32 = 4
    s = NP * K * NP * f32
    w1 = K * NP * Hp * f32
    w2 = K * Hp * Cp * f32
    out = NP * Cp * f32
    h = NP * Hp * f32
    pre = NP * Cp * f32
    # inputs/outputs may be double-buffered; intermediates + a live copy of S.
    return 2 * (s + w1 + w2 + out) + h + pre + s


# ----------------------------------------------------------------------------
# General tiled matmul (large-graph path): out = act(A @ B), f32 accumulation
# directly in the output block (reduction axis last, "arbitrary").
# ----------------------------------------------------------------------------
def _matmul_kernel(a_ref, b_ref, o_ref, *, apply_relu):
    k = pl.program_id(2)

    @pl.when(k == 0)
    def _():
        o_ref[...] = jnp.zeros_like(o_ref)

    o_ref[...] += jnp.dot(a_ref[...], b_ref[...],
                          preferred_element_type=jnp.float32)

    if apply_relu:
        @pl.when(k == pl.num_programs(2) - 1)
        def _():
            o_ref[...] = jnp.maximum(o_ref[...], 0.0)


def pallas_matmul(a, b, apply_relu=False, tm=256, tk=512, tn=512):
    M, K = a.shape
    Kb, N = b.shape
    assert K == Kb, (a.shape, b.shape)

    tm = min(tm, _round_up(M, 8))
    tk = min(tk, _round_up(K, 128))
    tn = min(tn, _round_up(N, 128))
    Mp, Kp, Np = _round_up(M, tm), _round_up(K, tk), _round_up(N, tn)

    a_p = jnp.pad(a, ((0, Mp - M), (0, Kp - K))) if (Mp, Kp) != (M, K) else a
    b_p = jnp.pad(b, ((0, Kp - K), (0, Np - N))) if (Kp, Np) != (K, N) else b

    out = pl.pallas_call(
        functools.partial(_matmul_kernel, apply_relu=apply_relu),
        out_shape=jax.ShapeDtypeStruct((Mp, Np), jnp.float32),
        grid_spec=pltpu.PrefetchScalarGridSpec(
            num_scalar_prefetch=0,
            grid=(Mp // tm, Np // tn, Kp // tk),
            in_specs=[
                pl.BlockSpec((tm, tk), lambda i, j, k: (i, k)),
                pl.BlockSpec((tk, tn), lambda i, j, k: (k, j)),
            ],
            out_specs=pl.BlockSpec((tm, tn), lambda i, j, k: (i, j)),
        ),
        compiler_params=pltpu.CompilerParams(
            dimension_semantics=("parallel", "parallel", "arbitrary"),
            vmem_limit_bytes=_VMEM_LIMIT_BYTES,
        ),
    )(a_p, b_p)

    if (Mp, Np) != (M, N):
        out = out[:M, :N]
    return out


# ----------------------------------------------------------------------------
# GCN forward
# ----------------------------------------------------------------------------
def gcn_forward(x, supports, W1, W2, force_unfused=False):
    """supports: (K,N,N), W1: (K,N,H), W2: (K,H,C) -> (N,C) float32."""
    # x is unused: layer1 is featureless and dropout_rate == 0.0 (identity).
    del x
    K, N, M = supports.shape
    assert M == N, "Text-GCN layer 2 requires square (N x N) supports"
    assert W1.shape[0] == K and W1.shape[1] == M, W1.shape
    H = W1.shape[2]
    assert W2.shape[0] == K and W2.shape[1] == H, W2.shape
    C = W2.shape[2]

    # Lane-dense padding (multiples of 128 so every slice / store is full-width).
    NP = _round_up(N, 128)
    Hp = _round_up(H, 128)
    Cp = _round_up(C, 128)

    s_pad = jnp.pad(supports, ((0, 0), (0, NP - N), (0, NP - N)))
    s_cat = jnp.transpose(s_pad, (1, 0, 2)).reshape(NP, K * NP)   # [S_0|...|S_{K-1}]
    w1_pad = jnp.pad(W1, ((0, 0), (0, NP - M), (0, Hp - H)))
    w1_cat = w1_pad.reshape(K * NP, Hp)                           # vstack(W1_i)
    w2_pad = jnp.pad(W2, ((0, 0), (0, Hp - H), (0, Cp - C)))      # (K, Hp, Cp)

    if (not force_unfused) and _fused_vmem_bytes(NP, K, Hp, Cp) <= _FUSED_VMEM_BUDGET:
        out_p = _gcn_fused(s_cat, w1_cat, w2_pad, NP, K, Hp, Cp)
    else:
        # Layer 1: H = relu(S_cat @ W1_cat)
        h = pallas_matmul(s_cat, w1_cat, apply_relu=True)          # (NP, Hp)
        # Layer 2: pre_cat = vstack_i(H @ W2_i), out = S_cat @ pre_cat
        w2_h = jnp.transpose(w2_pad, (1, 0, 2)).reshape(Hp, K * Cp)
        pre = pallas_matmul(h, w2_h)                               # (NP, K*Cp)
        pre_cat = pre.reshape(NP, K, Cp).transpose(1, 0, 2).reshape(K * NP, Cp)
        out_p = pallas_matmul(s_cat, pre_cat)                      # (NP, Cp)

    return out_p[:N, :C]


def gcn_reference(supports, W1, W2):
    h = jnp.maximum(
        sum(supports[i] @ W1[i] for i in range(supports.shape[0])), 0.0)
    out = sum(supports[i] @ (h @ W2[i]) for i in range(supports.shape[0]))
    return out


if __name__ == "__main__":
    # Small, deterministic synthetic problem.
    # Text-GCN convention: input_dim == num_nodes, support matrices are N x N.
    N = 64            # num nodes == input_dim
    K = 2             # len(support)
    HIDDEN = 200      # layer1 output dim
    NUM_CLASSES = 10  # layer2 output dim

    key = jax.random.PRNGKey(0)
    k_s, k_w1, k_w2, k_x = jax.random.split(key, 4)

    supports = jax.random.normal(k_s, (K, N, N), dtype=jnp.float32) * 0.1
    W1 = jax.random.normal(k_w1, (K, N, HIDDEN), dtype=jnp.float32)
    W2 = jax.random.normal(k_w2, (K, HIDDEN, NUM_CLASSES), dtype=jnp.float32)
    x = jax.random.normal(k_x, (N, N), dtype=jnp.float32)  # unused (featureless)

    ref = gcn_reference(supports, W1, W2)

    # Fused (single pallas_call) path -- chosen automatically for small graphs.
    out_fused = jax.block_until_ready(gcn_forward(x, supports, W1, W2))
    assert out_fused.shape == (N, NUM_CLASSES), out_fused.shape
    assert jnp.allclose(out_fused, ref, atol=5e-3, rtol=1e-3), (
        float(jnp.max(jnp.abs(out_fused - ref))))

    # Tiled multi-call path (used for large graphs) -- exercised here too.
    out_tiled = jax.block_until_ready(
        gcn_forward(x, supports, W1, W2, force_unfused=True))
    assert out_tiled.shape == (N, NUM_CLASSES), out_tiled.shape
    assert jnp.allclose(out_tiled, ref, atol=5e-3, rtol=1e-3), (
        float(jnp.max(jnp.abs(out_tiled - ref))))

    print("KERNEL_OK")
</pallas_src>

<mosaic_0001>
module attributes {stable_mosaic.version = 11 : i64} {
  func.func @_fused_gcn_kernel(%arg0: i32, %arg1: memref<128x256xf32, #tpu.memory_space<vmem>>, %arg2: memref<256x256xf32, #tpu.memory_space<vmem>>, %arg3: memref<2x256x128xf32, #tpu.memory_space<vmem>>, %arg4: memref<128x128xf32, #tpu.memory_space<vmem>>) attributes {dimension_semantics = [#tpu.dimension_semantics<arbitrary>], iteration_bounds = array<i64: 1>, scalar_prefetch = 0 : i64, scratch_operands = 0 : i64, tpu.core_type = #tpu.core_type<tc>, window_params = [{pipeline_mode = #tpu.pipeline_mode<synchronous>, transform_indices = @transform_0, window_bounds = array<i64: 128, 256>}, {pipeline_mode = #tpu.pipeline_mode<synchronous>, transform_indices = @transform_1, window_bounds = array<i64: 256, 256>}, {pipeline_mode = #tpu.pipeline_mode<synchronous>, transform_indices = @transform_2, window_bounds = array<i64: 2, 256, 128>}, {pipeline_mode = #tpu.pipeline_mode<synchronous>, transform_indices = @transform_3, window_bounds = array<i64: 128, 128>}]} {
    %c0 = arith.constant 0 : index
    %c0_0 = arith.constant 0 : index
    %0 = vector.load %arg1[%c0, %c0_0] : memref<128x256xf32, #tpu.memory_space<vmem>>, vector<128x256xf32>
    %c0_1 = arith.constant 0 : index
    %c0_2 = arith.constant 0 : index
    %1 = vector.load %arg2[%c0_1, %c0_2] : memref<256x256xf32, #tpu.memory_space<vmem>>, vector<256x256xf32>
    %cst = arith.constant dense<0.000000e+00> : vector<128x256xf32>
    %2 = tpu.matmul %0, %1, %cst {dimension_numbers = #tpu.dot_dimension_numbers<[1], [0], [0], [1], [0, 0, 1, 1], [], []>} : vector<128x256xf32>, vector<256x256xf32>, vector<128x256xf32> -> vector<128x256xf32>
    %cst_3 = arith.constant 0.000000e+00 : f32
    %3 = vector.broadcast %cst_3 : f32 to vector<128x256xf32>
    %4 = arith.maximumf %2, %3 : vector<128x256xf32>
    %cst_4 = arith.constant 0.000000e+00 : f32
    %5 = vector.broadcast %cst_4 : f32 to vector<128x128xf32>
    %c0_5 = arith.constant 0 : index
    %c0_6 = arith.constant 0 : index
    %c0_7 = arith.constant 0 : index
    %6 = vector.load %arg3[%c0_5, %c0_6, %c0_7] : memref<2x256x128xf32, #tpu.memory_space<vmem>>, vector<1x256x128xf32>
    %7 = vector.shape_cast %6 : vector<1x256x128xf32> to vector<256x128xf32>
    %cst_8 = arith.constant dense<0.000000e+00> : vector<128x128xf32>
    %8 = tpu.matmul %4, %7, %cst_8 {dimension_numbers = #tpu.dot_dimension_numbers<[1], [0], [0], [1], [0, 0, 1, 1], [], []>} : vector<128x256xf32>, vector<256x128xf32>, vector<128x128xf32> -> vector<128x128xf32>
    %c0_9 = arith.constant 0 : index
    %c0_10 = arith.constant 0 : index
    %9 = vector.load %arg1[%c0_9, %c0_10] : memref<128x256xf32, #tpu.memory_space<vmem>>, vector<128x128xf32>
    %cst_11 = arith.constant dense<0.000000e+00> : vector<128x128xf32>
    %10 = tpu.matmul %9, %8, %cst_11 {dimension_numbers = #tpu.dot_dimension_numbers<[1], [0], [0], [1], [0, 0, 1, 1], [], []>} : vector<128x128xf32>, vector<128x128xf32>, vector<128x128xf32> -> vector<128x128xf32>
    %11 = arith.addf %5, %10 : vector<128x128xf32>
    %c1 = arith.constant 1 : index
    %c0_12 = arith.constant 0 : index
    %c0_13 = arith.constant 0 : index
    %12 = vector.load %arg3[%c1, %c0_12, %c0_13] : memref<2x256x128xf32, #tpu.memory_space<vmem>>, vector<1x256x128xf32>
    %13 = vector.shape_cast %12 : vector<1x256x128xf32> to vector<256x128xf32>
    %cst_14 = arith.constant dense<0.000000e+00> : vector<128x128xf32>
    %14 = tpu.matmul %4, %13, %cst_14 {dimension_numbers = #tpu.dot_dimension_numbers<[1], [0], [0], [1], [0, 0, 1, 1], [], []>} : vector<128x256xf32>, vector<256x128xf32>, vector<128x128xf32> -> vector<128x128xf32>
    %c0_15 = arith.constant 0 : index
    %c128 = arith.constant 128 : index
    %15 = vector.load %arg1[%c0_15, %c128] : memref<128x256xf32, #tpu.memory_space<vmem>>, vector<128x128xf32>
    %cst_16 = arith.constant dense<0.000000e+00> : vector<128x128xf32>
    %16 = tpu.matmul %15, %14, %cst_16 {dimension_numbers = #tpu.dot_dimension_numbers<[1], [0], [0], [1], [0, 0, 1, 1], [], []>} : vector<128x128xf32>, vector<128x128xf32>, vector<128x128xf32> -> vector<128x128xf32>
    %17 = arith.addf %11, %16 : vector<128x128xf32>
    %c0_17 = arith.constant 0 : index
    %c0_18 = arith.constant 0 : index
    %18 = vector.load %arg4[%c0_17, %c0_18] : memref<128x128xf32, #tpu.memory_space<vmem>>, vector<128x128xf32>
    tpu.vector_store %arg4[%c0_17, %c0_18], %17 {strides = array<i32>} : memref<128x128xf32, #tpu.memory_space<vmem>>, vector<128x128xf32>,
    return
  }
  func.func @transform_0(%arg0: i32) -> (i32, i32) {
    %c0_i32 = arith.constant 0 : i32
    %c0_i32_0 = arith.constant 0 : i32
    %c0_i32_1 = arith.constant 0 : i32
    return %c0_i32, %c0_i32_0 : i32, i32
  }
  func.func @transform_1(%arg0: i32) -> (i32, i32) {
    %c0_i32 = arith.constant 0 : i32
    %c0_i32_0 = arith.constant 0 : i32
    %c0_i32_1 = arith.constant 0 : i32
    return %c0_i32, %c0_i32_0 : i32, i32
  }
  func.func @transform_2(%arg0: i32) -> (i32, i32, i32) {
    %c0_i32 = arith.constant 0 : i32
    %c0_i32_0 = arith.constant 0 : i32
    %c0_i32_1 = arith.constant 0 : i32
    %c0_i32_2 = arith.constant 0 : i32
    return %c0_i32, %c0_i32_0, %c0_i32_1 : i32, i32, i32
  }
  func.func @transform_3(%arg0: i32) -> (i32, i32) {
    %c0_i32 = arith.constant 0 : i32
    %c0_i32_0 = arith.constant 0 : i32
    %c0_i32_1 = arith.constant 0 : i32
    return %c0_i32, %c0_i32_0 : i32, i32
  }
}

</mosaic_0001>

<llo_original>
// kernel: tpu_custom_call.1
$region0: #{tpu_custom_call.1}
  #allocation0 [shape = 'u32[]', space=smem, size = 0x4, offset = 0x4, fixed_abs, tag = 'smem constant byte address 0x4 - core index']
  #allocation1 [shape = 'u32[144,128]{1,0:T(1,128)}', space=vmem, size = 0x12000, scoped, tag = 'internal scratch']
  %s0 = inlined_call_operand.hbm [shape: f32[128,256], index: 0, kind: input, shape index: {}]
  %s1 = inlined_call_operand.hbm [shape: f32[256,256], index: 1, kind: input, shape index: {}]
  %s2 = inlined_call_operand.hbm [shape: f32[2,256,128], index: 2, kind: input, shape index: {}]
  %s3 = inlined_call_operand.hbm [shape: f32[128,128], index: 3, kind: output, shape index: {}]
  %s4 = sld [smem:[#allocation0]]
  $region34: #{tpu_custom_call.1} parent=0
    _
  %s6 = ssub.s32 1, %s4
  %s7 = scalar_select 0, %s6, %s4
  $region1: #{tpu_custom_call.1} parent=0
    #allocation2 [shape = 'u8[131072]{0}', space=vmem, size = 0x20000, scoped, tag = 'input window, operand 0, single buffered']
    #allocation3 [shape = 's32[1]{0}', space=sflag, size = 0x4, scoped, tag = 'scoped memory for tpu_custom_call.1']
    #allocation4 [shape = 's32[1]{0}', space=sflag, size = 0x4, scoped, tag = 'scoped memory for tpu_custom_call.1']
    #allocation5 [shape = 'u8[262144]{0}', space=vmem, size = 0x40000, scoped, tag = 'input window, operand 1, single buffered']
    #allocation6 [shape = 's32[1]{0}', space=sflag, size = 0x4, scoped, tag = 'scoped memory for tpu_custom_call.1']
    #allocation7 [shape = 'u8[262144]{0}', space=vmem, size = 0x40000, scoped, tag = 'input window, operand 2, single buffered']
    #allocation8 [shape = 'u8[65536]{0}', space=vmem, size = 0x10000, scoped, tag = 'output window, operand 0, single buffered']
    %8 = vsyncpa [#allocation3], 0
    %9 = vsyncpa [#allocation6], 0
    %10 = vsyncpa [#allocation4], 0
    // Predicated region
    $region2: #{tpu_custom_call.1} parent=1 // pred_check
      _
    $region3: #{tpu_custom_call.1} parent=1 // pred_check_branch
      %12 = sbr.rel (0) target = $region5
    $region4: #{tpu_custom_call.1} parent=1 // pred_region
      %s14 = ssub.s32 4096, 4096
      %15 = vsyncadd [#allocation3], %s14
      %s16 = sshll.u32 [#allocation2], 4
      %s17 = int_to_ptr.vmem [resolvable:$true] %s16
      %22 = dma.hbm_to_vmem [thread:$0]  %s0, 4096, %s17, [#allocation3], 256, 256, 16
    $region5: #{tpu_custom_call.1} parent=1 // pred_fallthru
      _
    // Predicated region
    $region6: #{tpu_custom_call.1} parent=1 // pred_check
      _
    $region7: #{tpu_custom_call.1} parent=1 // pred_check_branch
      %24 = sbr.rel (0) target = $region9
    $region8: #{tpu_custom_call.1} parent=1 // pred_region
      %s26 = ssub.s32 8192, 8192
      %27 = vsyncadd [#allocation6], %s26
      %s28 = sshll.u32 [#allocation5], 4
      %s29 = int_to_ptr.vmem [resolvable:$true] %s28
      %34 = dma.hbm_to_vmem [thread:$0]  %s1, 8192, %s29, [#allocation6], 256, 256, 16
    $region9: #{tpu_custom_call.1} parent=1 // pred_fallthru
      _
    // Predicated region
    $region10: #{tpu_custom_call.1} parent=1 // pred_check
      _
    $region11: #{tpu_custom_call.1} parent=1 // pred_check_branch
      %36 = sbr.rel (0) target = $region13
    $region12: #{tpu_custom_call.1} parent=1 // pred_region
      %s38 = ssub.s32 8192, 8192
      %39 = vsyncadd [#allocation6], %s38
      %s40 = sshll.u32 [#allocation7], 4
      %s41 = int_to_ptr.vmem [resolvable:$true] %s40
      %46 = dma.hbm_to_vmem [thread:$0]  %s2, 8192, %s41, [#allocation6], 128, 128, 8
    $region13: #{tpu_custom_call.1} parent=1 // pred_fallthru
      _
    // Predicated region
    $region14: #{tpu_custom_call.1} parent=1 // pred_check
      _
    $region15: #{tpu_custom_call.1} parent=1 // pred_check_branch
      %48 = sbr.rel (0) target = $region17
    $region16: #{tpu_custom_call.1} parent=1 // pred_region
      %49 = dma.done [#allocation3], 4096
    $region17: #{tpu_custom_call.1} parent=1 // pred_fallthru
      _
    // Predicated region
    $region18: #{tpu_custom_call.1} parent=1 // pred_check
      _
    $region19: #{tpu_custom_call.1} parent=1 // pred_check_branch
      %51 = sbr.rel (0) target = $region21
    $region20: #{tpu_custom_call.1} parent=1 // pred_region
      %52 = dma.done [#allocation6], 8192
    $region21: #{tpu_custom_call.1} parent=1 // pred_fallthru
      _
    // Predicated region
    $region22: #{tpu_custom_call.1} parent=1 // pred_check
      _
    $region23: #{tpu_custom_call.1} parent=1 // pred_check_branch
      %54 = sbr.rel (0) target = $region25
    $region24: #{tpu_custom_call.1} parent=1 // pred_region
      %55 = dma.done [#allocation6], 8192
    $region25: #{tpu_custom_call.1} parent=1 // pred_fallthru
      _
    %v56 = vld [vmem:[#allocation2] sm:$0xff]
    %v57 = vld [vmem:[#allocation2 + $0x8] sm:$0xff]
    %v58 = vld [vmem:[#allocation2 + $0x10] sm:$0xff]
    %v59 = vld [vmem:[#allocation2 + $0x18] sm:$0xff]
    %v60 = vld [vmem:[#allocation2 + $0x20] sm:$0xff]
    %v61 = vld [vmem:[#allocation2 + $0x28] sm:$0xff]
    %v62 = vld [vmem:[#allocation2 + $0x30] sm:$0xff]
    %v63 = vld [vmem:[#allocation2 + $0x38] sm:$0xff]
    %v64 = vld [vmem:[#allocation2 + $0x40] sm:$0xff]
    %v65 = vld [vmem:[#allocation2 + $0x48] sm:$0xff]
    %v66 = vld [vmem:[#allocation2 + $0x50] sm:$0xff]
    %v67 = vld [vmem:[#allocation2 + $0x58] sm:$0xff]
    %v68 = vld [vmem:[#allocation2 + $0x60] sm:$0xff]
    %v69 = vld [vmem:[#allocation2 + $0x68] sm:$0xff]
    %v70 = vld [vmem:[#allocation2 + $0x70] sm:$0xff]
    %v71 = vld [vmem:[#allocation2 + $0x78] sm:$0xff]
    %v72 = vld [vmem:[#allocation2 + $0x80] sm:$0xff]
    %v73 = vld [vmem:[#allocation2 + $0x88] sm:$0xff]
    %v74 = vld [vmem:[#allocation2 + $0x90] sm:$0xff]
    %v75 = vld [vmem:[#allocation2 + $0x98] sm:$0xff]
    %v76 = vld [vmem:[#allocation2 + $0xa0] sm:$0xff]
    %v77 = vld [vmem:[#allocation2 + $0xa8] sm:$0xff]
    %v78 = vld [vmem:[#allocation2 + $0xb0] sm:$0xff]
    %v79 = vld [vmem:[#allocation2 + $0xb8] sm:$0xff]
    %v80 = vld [vmem:[#allocation2 + $0xc0] sm:$0xff]
    %v81 = vld [vmem:[#allocation2 + $0xc8] sm:$0xff]
    %v82 = vld [vmem:[#allocation2 + $0xd0] sm:$0xff]
    %v83 = vld [vmem:[#allocation2 + $0xd8] sm:$0xff]
    %v84 = vld [vmem:[#allocation2 + $0xe0] sm:$0xff]
    %v85 = vld [vmem:[#allocation2 + $0xe8] sm:$0xff]
    %v86 = vld [vmem:[#allocation2 + $0xf0] sm:$0xff]
    %v87 = vld [vmem:[#allocation2 + $0xf8] sm:$0xff]
    %v88 = vld [vmem:[#allocation5] sm:$0xff]
    %v89 = vld [vmem:[#allocation5 + $0x8] sm:$0xff]
    %v90 = vld [vmem:[#allocation5 + $0x10] sm:$0xff]
    %v91 = vld [vmem:[#allocation5 + $0x18] sm:$0xff]
    %v92 = vld [vmem:[#allocation5 + $0x20] sm:$0xff]
    %v93 = vld [vmem:[#allocation5 + $0x28] sm:$0xff]
    %v94 = vld [vmem:[#allocation5 + $0x30] sm:$0xff]
    %v95 = vld [vmem:[#allocation5 + $0x38] sm:$0xff]
    %v96 = vld [vmem:[#allocation5 + $0x40] sm:$0xff]
    %v97 = vld [vmem:[#allocation5 + $0x48] sm:$0xff]
    %v98 = vld [vmem:[#allocation5 + $0x50] sm:$0xff]
    %v99 = vld [vmem:[#allocation5 + $0x58] sm:$0xff]
    %v100 = vld [vmem:[#allocation5 + $0x60] sm:$0xff]
    %v101 = vld [vmem:[#allocation5 + $0x68] sm:$0xff]
    %v102 = vld [vmem:[#allocation5 + $0x70] sm:$0xff]
    %v103 = vld [vmem:[#allocation5 + $0x78] sm:$0xff]
    %v104 = vld [vmem:[#allocation5 + $0x80] sm:$0xff]
    %v105 = vld [vmem:[#allocation5 + $0x88] sm:$0xff]
    %v106 = vld [vmem:[#allocation5 + $0x90] sm:$0xff]
    %v107 = vld [vmem:[#allocation5 + $0x98] sm:$0xff]
    %v108 = vld [vmem:[#allocation5 + $0xa0] sm:$0xff]
    %v109 = vld [vmem:[#allocation5 + $0xa8] sm:$0xff]
    %v110 = vld [vmem:[#allocation5 + $0xb0] sm:$0xff]
    %v111 = vld [vmem:[#allocation5 + $0xb8] sm:$0xff]
    %v112 = vld [vmem:[#allocation5 + $0xc0] sm:$0xff]
    %v113 = vld [vmem:[#allocation5 + $0xc8] sm:$0xff]
    %v114 = vld [vmem:[#allocation5 + $0xd0] sm:$0xff]
    %v115 = vld [vmem:[#allocation5 + $0xd8] sm:$0xff]
    %v116 = vld [vmem:[#allocation5 + $0xe0] sm:$0xff]
    %v117 = vld [vmem:[#allocation5 + $0xe8] sm:$0xff]
    %v118 = vld [vmem:[#allocation5 + $0xf0] sm:$0xff]
    %v119 = vld [vmem:[#allocation5 + $0xf8] sm:$0xff]
    %v120 = vld [vmem:[#allocation5 + $0x100] sm:$0xff]
    %v121 = vld [vmem:[#allocation5 + $0x108] sm:$0xff]
    %v122 = vld [vmem:[#allocation5 + $0x110] sm:$0xff]
    %v123 = vld [vmem:[#allocation5 + $0x118] sm:$0xff]
    %v124 = vld [vmem:[#allocation5 + $0x120] sm:$0xff]
    %v125 = vld [vmem:[#allocation5 + $0x128] sm:$0xff]
    %v126 = vld [vmem:[#allocation5 + $0x130] sm:$0xff]
    %v127 = vld [vmem:[#allocation5 + $0x138] sm:$0xff]
    %v128 = vld [vmem:[#allocation5 + $0x140] sm:$0xff]
    %v129 = vld [vmem:[#allocation5 + $0x148] sm:$0xff]
    %v130 = vld [vmem:[#allocation5 + $0x150] sm:$0xff]
    %v131 = vld [vmem:[#allocation5 + $0x158] sm:$0xff]
    %v132 = vld [vmem:[#allocation5 + $0x160] sm:$0xff]
    %v133 = vld [vmem:[#allocation5 + $0x168] sm:$0xff]
    %v134 = vld [vmem:[#allocation5 + $0x170] sm:$0xff]
    %v135 = vld [vmem:[#allocation5 + $0x178] sm:$0xff]
    %v136 = vld [vmem:[#allocation5 + $0x180] sm:$0xff]
    %v137 = vld [vmem:[#allocation5 + $0x188] sm:$0xff]
    %v138 = vld [vmem:[#allocation5 + $0x190] sm:$0xff]
    %v139 = vld [vmem:[#allocation5 + $0x198] sm:$0xff]
    %v140 = vld [vmem:[#allocation5 + $0x1a0] sm:$0xff]
    %v141 = vld [vmem:[#allocation5 + $0x1a8] sm:$0xff]
    %v142 = vld [vmem:[#allocation5 + $0x1b0] sm:$0xff]
    %v143 = vld [vmem:[#allocation5 + $0x1b8] sm:$0xff]
    %v144 = vld [vmem:[#allocation5 + $0x1c0] sm:$0xff]
    %v145 = vld [vmem:[#allocation5 + $0x1c8] sm:$0xff]
    %v146 = vld [vmem:[#allocation5 + $0x1d0] sm:$0xff]
    %v147 = vld [vmem:[#allocation5 + $0x1d8] sm:$0xff]
    %v148 = vld [vmem:[#allocation5 + $0x1e0] sm:$0xff]
    %v149 = vld [vmem:[#allocation5 + $0x1e8] sm:$0xff]
    %v150 = vld [vmem:[#allocation5 + $0x1f0] sm:$0xff]
    %v151 = vld [vmem:[#allocation5 + $0x1f8] sm:$0xff]
    %152 = vmatprep.subr.mxu0 %v89
    %153 = vmatpush1.msra.mxu0 %v88
    %154 = vmatprep.subr.mxu0 %v91
    %155 = vmatpush1.msra.mxu0 %v90
    %156 = vmatprep.subr.mxu0 %v93
    %157 = vmatpush1.msra.mxu0 %v92
    %158 = vmatprep.subr.mxu0 %v95
    %159 = vmatpush1.msra.mxu0 %v94
    %160 = vmatprep.subr.mxu0 %v97
    %161 = vmatpush1.msra.mxu0 %v96
    %162 = vmatprep.subr.mxu0 %v99
    %163 = vmatpush1.msra.mxu0 %v98
    %164 = vmatprep.subr.mxu0 %v101
    %165 = vmatpush1.msra.mxu0 %v100
    %166 = vmatprep.subr.mxu0 %v103
    %167 = vmatpush1.msra.mxu0 %v102
    %168 = vmatprep.subr.mxu0 %v105
    %169 = vmatpush1.msra.mxu0 %v104
    %170 = vmatprep.subr.mxu0 %v107
    %171 = vmatpush1.msra.mxu0 %v106
    %172 = vmatprep.subr.mxu0 %v109
    %173 = vmatpush1.msra.mxu0 %v108
    %174 = vmatprep.subr.mxu0 %v111
    %175 = vmatpush1.msra.mxu0 %v110
    %176 = vmatprep.subr.mxu0 %v113
    %177 = vmatpush1.msra.mxu0 %v112
    %178 = vmatprep.subr.mxu0 %v115
    %179 = vmatpush1.msra.mxu0 %v114
    %180 = vmatprep.subr.mxu0 %v117
    %181 = vmatpush1.msra.mxu0 %v116
    %182 = vmatprep.subr.mxu0 %v119
    %183 = vmatpush1.msra.mxu0 %v118
    %184 = vmatprep.subr.mxu0 %v121
    %185 = vmatpush1.msra.mxu0 %v120
    %186 = vmatprep.subr.mxu0 %v123
    %187 = vmatpush1.msra.mxu0 %v122
    %188 = vmatprep.subr.mxu0 %v125
    %189 = vmatpush1.msra.mxu0 %v124
    %190 = vmatprep.subr.mxu0 %v127
    %191 = vmatpush1.msra.mxu0 %v126
    %192 = vmatprep.subr.mxu0 %v129
    %193 = vmatpush1.msra.mxu0 %v128
    %194 = vmatprep.subr.mxu0 %v131
    %195 = vmatpush1.msra.mxu0 %v130
    %196 = vmatprep.subr.mxu0 %v133
    %197 = vmatpush1.msra.mxu0 %v132
    %198 = vmatprep.subr.mxu0 %v135
    %199 = vmatpush1.msra.mxu0 %v134
    %200 = vmatprep.subr.mxu0 %v137
    %201 = vmatpush1.msra.mxu0 %v136
    %202 = vmatprep.subr.mxu0 %v139
    %203 = vmatpush1.msra.mxu0 %v138
    %204 = vmatprep.subr.mxu0 %v141
    %205 = vmatpush1.msra.mxu0 %v140
    %206 = vmatprep.subr.mxu0 %v143
    %207 = vmatpush1.msra.mxu0 %v142
    %208 = vmatprep.subr.mxu0 %v145
    %209 = vmatpush1.msra.mxu0 %v144
    %210 = vmatprep.subr.mxu0 %v147
    %211 = vmatpush1.msra.mxu0 %v146
    %212 = vmatprep.subr.mxu0 %v149
    %213 = vmatpush1.msra.mxu0 %v148
    %214 = vmatprep.subr.mxu0 %v151
    %215 = vmatpush1.msra.mxu0 %v150
    %216 = vmatprep.mubr.f32.mxu0 %v57
    %217 = vmatmul.mubr.f32.gmra.mrb[0].mxu0 %v56
    %v218 = vpop.f32.mrb[0].mxu0
    %v219 = vadd.f32 0.0, %v218
    %v220 = vpop.f32.mrb[0].mxu0
    %v221 = vadd.f32 0.0, %v220
    %222 = vmatprep.mubr.f32.mxu0 %v59
    %223 = vmatmul.mubr.f32.gmra.mrb[0].mxu0 %v58
    %v224 = vpop.f32.mrb[0].mxu0
    %v225 = vadd.f32 0.0, %v224
    %v226 = vpop.f32.mrb[0].mxu0
    %v227 = vadd.f32 0.0, %v226
    %228 = vmatprep.mubr.f32.mxu0 %v61
    %229 = vmatmul.mubr.f32.gmra.mrb[0].mxu0 %v60
    %v230 = vpop.f32.mrb[0].mxu0
    %v231 = vadd.f32 0.0, %v230
    %v232 = vpop.f32.mrb[0].mxu0
    %v233 = vadd.f32 0.0, %v232
    %234 = vmatprep.mubr.f32.mxu0 %v63
    %235 = vmatmul.mubr.f32.gmra.mrb[0].mxu0 %v62
    %v236 = vpop.f32.mrb[0].mxu0
    %v237 = vadd.f32 0.0, %v236
    %v238 = vpop.f32.mrb[0].mxu0
    %v239 = vadd.f32 0.0, %v238
    %240 = vmatprep.mubr.f32.mxu0 %v65
    %241 = vmatmul.mubr.f32.gmra.mrb[0].mxu0 %v64
    %v242 = vpop.f32.mrb[0].mxu0
    %v243 = vadd.f32 0.0, %v242
    %v244 = vpop.f32.mrb[0].mxu0
    %v245 = vadd.f32 0.0, %v244
    %246 = vmatprep.mubr.f32.mxu0 %v67
    %247 = vmatmul.mubr.f32.gmra.mrb[0].mxu0 %v66
    %v248 = vpop.f32.mrb[0].mxu0
    %v249 = vadd.f32 0.0, %v248
    %v250 = vpop.f32.mrb[0].mxu0
    %v251 = vadd.f32 0.0, %v250
    %252 = vmatprep.mubr.f32.mxu0 %v69
    %253 = vmatmul.mubr.f32.gmra.mrb[0].mxu0 %v68
    %v254 = vpop.f32.mrb[0].mxu0
    %v255 = vadd.f32 0.0, %v254
    %v256 = vpop.f32.mrb[0].mxu0
    %v257 = vadd.f32 0.0, %v256
    %258 = vmatprep.mubr.f32.mxu0 %v71
    %259 = vmatmul.mubr.f32.gmra.mrb[0].mxu0 %v70
    %v260 = vpop.f32.mrb[0].mxu0
    %v261 = vadd.f32 0.0, %v260
    %v262 = vpop.f32.mrb[0].mxu0
    %v263 = vadd.f32 0.0, %v262
    %264 = vmatprep.mubr.f32.mxu0 %v73
    %265 = vmatmul.mubr.f32.gmra.mrb[0].mxu0 %v72
    %v266 = vpop.f32.mrb[0].mxu0
    %v267 = vadd.f32 0.0, %v266
    %v268 = vpop.f32.mrb[0].mxu0
    %v269 = vadd.f32 0.0, %v268
    %270 = vmatprep.mubr.f32.mxu0 %v75
    %271 = vmatmul.mubr.f32.gmra.mrb[0].mxu0 %v74
    %v272 = vpop.f32.mrb[0].mxu0
    %v273 = vadd.f32 0.0, %v272
    %v274 = vpop.f32.mrb[0].mxu0
    %v275 = vadd.f32 0.0, %v274
    %276 = vmatprep.mubr.f32.mxu0 %v77
    %277 = vmatmul.mubr.f32.gmra.mrb[0].mxu0 %v76
    %v278 = vpop.f32.mrb[0].mxu0
    %v279 = vadd.f32 0.0, %v278
    %v280 = vpop.f32.mrb[0].mxu0
    %v281 = vadd.f32 0.0, %v280
    %282 = vmatprep.mubr.f32.mxu0 %v79
    %283 = vmatmul.mubr.f32.gmra.mrb[0].mxu0 %v78
    %v284 = vpop.f32.mrb[0].mxu0
    %v285 = vadd.f32 0.0, %v284
    %v286 = vpop.f32.mrb[0].mxu0
    %v287 = vadd.f32 0.0, %v286
    %288 = vmatprep.mubr.f32.mxu0 %v81
    %289 = vmatmul.mubr.f32.gmra.mrb[0].mxu0 %v80
    %v290 = vpop.f32.mrb[0].mxu0
    %v291 = vadd.f32 0.0, %v290
    %v292 = vpop.f32.mrb[0].mxu0
    %v293 = vadd.f32 0.0, %v292
    %294 = vmatprep.mubr.f32.mxu0 %v83
    %295 = vmatmul.mubr.f32.gmra.mrb[0].mxu0 %v82
    %v296 = vpop.f32.mrb[0].mxu0
    %v297 = vadd.f32 0.0, %v296
    %v298 = vpop.f32.mrb[0].mxu0
    %v299 = vadd.f32 0.0, %v298
    %300 = vmatprep.mubr.f32.mxu0 %v85
    %301 = vmatmul.mubr.f32.gmra.mrb[0].mxu0 %v84
    %v302 = vpop.f32.mrb[0].mxu0
    %v303 = vadd.f32 0.0, %v302
    %v304 = vpop.f32.mrb[0].mxu0
    %v305 = vadd.f32 0.0, %v304
    %306 = vmatprep.mubr.f32.mxu0 %v87
    %307 = vmatmul.mubr.f32.gmra.mrb[0].mxu0 %v86
    %v308 = vpop.f32.mrb[0].mxu0
    %v309 = vadd.f32 0.0, %v308
    %v310 = vpop.f32.mrb[0].mxu0
    %v311 = vadd.f32 0.0, %v310
    %312 = vdwg.mxu0
    %v313 = vmax.f32 %v219, 0.0
    %v314 = vmax.f32 %v221, 0.0
    %v315 = vmax.f32 %v225, 0.0
    %v316 = vmax.f32 %v227, 0.0
    %v317 = vmax.f32 %v231, 0.0
    %v318 = vmax.f32 %v233, 0.0
    %v319 = vmax.f32 %v237, 0.0
    %v320 = vmax.f32 %v239, 0.0
    %v321 = vmax.f32 %v243, 0.0
    %v322 = vmax.f32 %v245, 0.0
    %v323 = vmax.f32 %v249, 0.0
    %v324 = vmax.f32 %v251, 0.0
    %v325 = vmax.f32 %v255, 0.0
    %v326 = vmax.f32 %v257, 0.0
    %v327 = vmax.f32 %v261, 0.0
    %v328 = vmax.f32 %v263, 0.0
    %v329 = vmax.f32 %v267, 0.0
    %v330 = vmax.f32 %v269, 0.0
    %v331 = vmax.f32 %v273, 0.0
    %v332 = vmax.f32 %v275, 0.0
    %v333 = vmax.f32 %v279, 0.0
    %v334 = vmax.f32 %v281, 0.0
    %v335 = vmax.f32 %v285, 0.0
    %v336 = vmax.f32 %v287, 0.0
    %v337 = vmax.f32 %v291, 0.0
    %v338 = vmax.f32 %v293, 0.0
    %v339 = vmax.f32 %v297, 0.0
    %v340 = vmax.f32 %v299, 0.0
    %v341 = vmax.f32 %v303, 0.0
    %v342 = vmax.f32 %v305, 0.0
    %v343 = vmax.f32 %v309, 0.0
    %v344 = vmax.f32 %v311, 0.0
    %v345 = vld [vmem:[#allocation7] sm:$0xff]
    %v346 = vld [vmem:[#allocation7 + $0x8] sm:$0xff]
    %v347 = vld [vmem:[#allocation7 + $0x10] sm:$0xff]
    %v348 = vld [vmem:[#allocation7 + $0x18] sm:$0xff]
    %v349 = vld [vmem:[#allocation7 + $0x20] sm:$0xff]
    %v350 = vld [vmem:[#allocation7 + $0x28] sm:$0xff]
    %v351 = vld [vmem:[#allocation7 + $0x30] sm:$0xff]
    %v352 = vld [vmem:[#allocation7 + $0x38] sm:$0xff]
    %v353 = vld [vmem:[#allocation7 + $0x40] sm:$0xff]
    %v354 = vld [vmem:[#allocation7 + $0x48] sm:$0xff]
    %v355 = vld [vmem:[#allocation7 + $0x50] sm:$0xff]
    %v356 = vld [vmem:[#allocation7 + $0x58] sm:$0xff]
    %v357 = vld [vmem:[#allocation7 + $0x60] sm:$0xff]
    %v358 = vld [vmem:[#allocation7 + $0x68] sm:$0xff]
    %v359 = vld [vmem:[#allocation7 + $0x70] sm:$0xff]
    %v360 = vld [vmem:[#allocation7 + $0x78] sm:$0xff]
    %v361 = vld [vmem:[#allocation7 + $0x80] sm:$0xff]
    %v362 = vld [vmem:[#allocation7 + $0x88] sm:$0xff]
    %v363 = vld [vmem:[#allocation7 + $0x90] sm:$0xff]
    %v364 = vld [vmem:[#allocation7 + $0x98] sm:$0xff]
    %v365 = vld [vmem:[#allocation7 + $0xa0] sm:$0xff]
    %v366 = vld [vmem:[#allocation7 + $0xa8] sm:$0xff]
    %v367 = vld [vmem:[#allocation7 + $0xb0] sm:$0xff]
    %v368 = vld [vmem:[#allocation7 + $0xb8] sm:$0xff]
    %v369 = vld [vmem:[#allocation7 + $0xc0] sm:$0xff]
    %v370 = vld [vmem:[#allocation7 + $0xc8] sm:$0xff]
    %v371 = vld [vmem:[#allocation7 + $0xd0] sm:$0xff]
    %v372 = vld [vmem:[#allocation7 + $0xd8] sm:$0xff]
    %v373 = vld [vmem:[#allocation7 + $0xe0] sm:$0xff]
    %v374 = vld [vmem:[#allocation7 + $0xe8] sm:$0xff]
    %v375 = vld [vmem:[#allocation7 + $0xf0] sm:$0xff]
    %v376 = vld [vmem:[#allocation7 + $0xf8] sm:$0xff]
    %377 = vmatprep.subr.mxu0 0.0
    %378 = vmatpush1.msra.mxu0 %v345
    %379 = vmatprep.subr.mxu0 0.0
    %380 = vmatpush1.msra.mxu0 %v346
    %381 = vmatprep.subr.mxu0 0.0
    %382 = vmatpush1.msra.mxu0 %v347
    %383 = vmatprep.subr.mxu0 0.0
    %384 = vmatpush1.msra.mxu0 %v348
    %385 = vmatprep.subr.mxu0 0.0
    %386 = vmatpush1.msra.mxu0 %v349
    %387 = vmatprep.subr.mxu0 0.0
    %388 = vmatpush1.msra.mxu0 %v350
    %389 = vmatprep.subr.mxu0 0.0
    %390 = vmatpush1.msra.mxu0 %v351
    %391 = vmatprep.subr.mxu0 0.0
    %392 = vmatpush1.msra.mxu0 %v352
    %393 = vmatprep.subr.mxu0 0.0
    %394 = vmatpush1.msra.mxu0 %v353
    %395 = vmatprep.subr.mxu0 0.0
    %396 = vmatpush1.msra.mxu0 %v354
    %397 = vmatprep.subr.mxu0 0.0
    %398 = vmatpush1.msra.mxu0 %v355
    %399 = vmatprep.subr.mxu0 0.0
    %400 = vmatpush1.msra.mxu0 %v356
    %401 = vmatprep.subr.mxu0 0.0
    %402 = vmatpush1.msra.mxu0 %v357
    %403 = vmatprep.subr.mxu0 0.0
    %404 = vmatpush1.msra.mxu0 %v358
    %405 = vmatprep.subr.mxu0 0.0
    %406 = vmatpush1.msra.mxu0 %v359
    %407 = vmatprep.subr.mxu0 0.0
    %408 = vmatpush1.msra.mxu0 %v360
    %409 = vmatprep.subr.mxu0 0.0
    %410 = vmatpush1.msra.mxu0 %v361
    %411 = vmatprep.subr.mxu0 0.0
    %412 = vmatpush1.msra.mxu0 %v362
    %413 = vmatprep.subr.mxu0 0.0
    %414 = vmatpush1.msra.mxu0 %v363
    %415 = vmatprep.subr.mxu0 0.0
    %416 = vmatpush1.msra.mxu0 %v364
    %417 = vmatprep.subr.mxu0 0.0
    %418 = vmatpush1.msra.mxu0 %v365
    %419 = vmatprep.subr.mxu0 0.0
    %420 = vmatpush1.msra.mxu0 %v366
    %421 = vmatprep.subr.mxu0 0.0
    %422 = vmatpush1.msra.mxu0 %v367
    %423 = vmatprep.subr.mxu0 0.0
    %424 = vmatpush1.msra.mxu0 %v368
    %425 = vmatprep.subr.mxu0 0.0
    %426 = vmatpush1.msra.mxu0 %v369
    %427 = vmatprep.subr.mxu0 0.0
    %428 = vmatpush1.msra.mxu0 %v370
    %429 = vmatprep.subr.mxu0 0.0
    %430 = vmatpush1.msra.mxu0 %v371
    %431 = vmatprep.subr.mxu0 0.0
    %432 = vmatpush1.msra.mxu0 %v372
    %433 = vmatprep.subr.mxu0 0.0
    %434 = vmatpush1.msra.mxu0 %v373
    %435 = vmatprep.subr.mxu0 0.0
    %436 = vmatpush1.msra.mxu0 %v374
    %437 = vmatprep.subr.mxu0 0.0
    %438 = vmatpush1.msra.mxu0 %v375
    %439 = vmatprep.subr.mxu0 0.0
    %440 = vmatpush1.msra.mxu0 %v376
    %441 = vmatprep.mubr.f32.mxu0 %v314
    %442 = vmatmul.mubr.f32.gmra.mrb[0].mxu0 %v313
    %v443 = vpop.f32.mrb[0].mxu0
    %v444 = vadd.f32 0.0, %v443
    %v445 = vpop.f32.mrb[0].mxu0
    %446 = vmatprep.mubr.f32.mxu0 %v316
    %447 = vmatmul.mubr.f32.gmra.mrb[0].mxu0 %v315
    %v448 = vpop.f32.mrb[0].mxu0
    %v449 = vadd.f32 0.0, %v448
    %v450 = vpop.f32.mrb[0].mxu0
    %451 = vmatprep.mubr.f32.mxu0 %v318
    %452 = vmatmul.mubr.f32.gmra.mrb[0].mxu0 %v317
    %v453 = vpop.f32.mrb[0].mxu0
    %v454 = vadd.f32 0.0, %v453
    %v455 = vpop.f32.mrb[0].mxu0
    %456 = vmatprep.mubr.f32.mxu0 %v320
    %457 = vmatmul.mubr.f32.gmra.mrb[0].mxu0 %v319
    %v458 = vpop.f32.mrb[0].mxu0
    %v459 = vadd.f32 0.0, %v458
    %v460 = vpop.f32.mrb[0].mxu0
    %461 = vmatprep.mubr.f32.mxu0 %v322
    %462 = vmatmul.mubr.f32.gmra.mrb[0].mxu0 %v321
    %v463 = vpop.f32.mrb[0].mxu0
    %v464 = vadd.f32 0.0, %v463
    %v465 = vpop.f32.mrb[0].mxu0
    %466 = vmatprep.mubr.f32.mxu0 %v324
    %467 = vmatmul.mubr.f32.gmra.mrb[0].mxu0 %v323
    %v468 = vpop.f32.mrb[0].mxu0
    %v469 = vadd.f32 0.0, %v468
    %v470 = vpop.f32.mrb[0].mxu0
    %471 = vmatprep.mubr.f32.mxu0 %v326
    %472 = vmatmul.mubr.f32.gmra.mrb[0].mxu0 %v325
    %v473 = vpop.f32.mrb[0].mxu0
    %v474 = vadd.f32 0.0, %v473
    %v475 = vpop.f32.mrb[0].mxu0
    %476 = vmatprep.mubr.f32.mxu0 %v328
    %477 = vmatmul.mubr.f32.gmra.mrb[0].mxu0 %v327
    %v478 = vpop.f32.mrb[0].mxu0
    %v479 = vadd.f32 0.0, %v478
    %v480 = vpop.f32.mrb[0].mxu0
    %481 = vmatprep.mubr.f32.mxu0 %v330
    %482 = vmatmul.mubr.f32.gmra.mrb[0].mxu0 %v329
    %v483 = vpop.f32.mrb[0].mxu0
    %v484 = vadd.f32 0.0, %v483
    %v485 = vpop.f32.mrb[0].mxu0
    %486 = vmatprep.mubr.f32.mxu0 %v332
    %487 = vmatmul.mubr.f32.gmra.mrb[0].mxu0 %v331
    %v488 = vpop.f32.mrb[0].mxu0
    %v489 = vadd.f32 0.0, %v488
    %v490 = vpop.f32.mrb[0].mxu0
    %491 = vmatprep.mubr.f32.mxu0 %v334
    %492 = vmatmul.mubr.f32.gmra.mrb[0].mxu0 %v333
    %v493 = vpop.f32.mrb[0].mxu0
    %v494 = vadd.f32 0.0, %v493
    %v495 = vpop.f32.mrb[0].mxu0
    %496 = vmatprep.mubr.f32.mxu0 %v336
    %497 = vmatmul.mubr.f32.gmra.mrb[0].mxu0 %v335
    %v498 = vpop.f32.mrb[0].mxu0
    %v499 = vadd.f32 0.0, %v498
    %v500 = vpop.f32.mrb[0].mxu0
    %501 = vmatprep.mubr.f32.mxu0 %v338
    %502 = vmatmul.mubr.f32.gmra.mrb[0].mxu0 %v337
    %v503 = vpop.f32.mrb[0].mxu0
    %v504 = vadd.f32 0.0, %v503
    %v505 = vpop.f32.mrb[0].mxu0
    %506 = vmatprep.mubr.f32.mxu0 %v340
    %507 = vmatmul.mubr.f32.gmra.mrb[0].mxu0 %v339
    %v508 = vpop.f32.mrb[0].mxu0
    %v509 = vadd.f32 0.0, %v508
    %v510 = vpop.f32.mrb[0].mxu0
    %511 = vmatprep.mubr.f32.mxu0 %v342
    %512 = vmatmul.mubr.f32.gmra.mrb[0].mxu0 %v341
    %v513 = vpop.f32.mrb[0].mxu0
    %v514 = vadd.f32 0.0, %v513
    %v515 = vpop.f32.mrb[0].mxu0
    %516 = vmatprep.mubr.f32.mxu0 %v344
    %517 = vmatmul.mubr.f32.gmra.mrb[0].mxu0 %v343
    %v518 = vpop.f32.mrb[0].mxu0
    %v519 = vadd.f32 0.0, %v518
    %v520 = vpop.f32.mrb[0].mxu0
    %521 = vdwg.mxu0
    %v522 = vld [vmem:[#allocation2] sm:$0xff]
    %v523 = vld [vmem:[#allocation2 + $0x10] sm:$0xff]
    %v524 = vld [vmem:[#allocation2 + $0x20] sm:$0xff]
    %v525 = vld [vmem:[#allocation2 + $0x30] sm:$0xff]
    %v526 = vld [vmem:[#allocation2 + $0x40] sm:$0xff]
    %v527 = vld [vmem:[#allocation2 + $0x50] sm:$0xff]
    %v528 = vld [vmem:[#allocation2 + $0x60] sm:$0xff]
    %v529 = vld [vmem:[#allocation2 + $0x70] sm:$0xff]
    %v530 = vld [vmem:[#allocation2 + $0x80] sm:$0xff]
    %v531 = vld [vmem:[#allocation2 + $0x90] sm:$0xff]
    %v532 = vld [vmem:[#allocation2 + $0xa0] sm:$0xff]
    %v533 = vld [vmem:[#allocation2 + $0xb0] sm:$0xff]
    %v534 = vld [vmem:[#allocation2 + $0xc0] sm:$0xff]
    %v535 = vld [vmem:[#allocation2 + $0xd0] sm:$0xff]
    %v536 = vld [vmem:[#allocation2 + $0xe0] sm:$0xff]
    %v537 = vld [vmem:[#allocation2 + $0xf0] sm:$0xff]
    %s538 = scalar_lea.vmem [#allocation7], 256
    %v539 = vld [vmem:[%s538] sm:$0xff]
    %v540 = vld [vmem:[%s538 + $0x8] sm:$0xff]
    %v541 = vld [vmem:[%s538 + $0x10] sm:$0xff]
    %v542 = vld [vmem:[%s538 + $0x18] sm:$0xff]
    %v543 = vld [vmem:[%s538 + $0x20] sm:$0xff]
    %v544 = vld [vmem:[%s538 + $0x28] sm:$0xff]
    %v545 = vld [vmem:[%s538 + $0x30] sm:$0xff]
    %v546 = vld [vmem:[%s538 + $0x38] sm:$0xff]
    %v547 = vld [vmem:[%s538 + $0x40] sm:$0xff]
    %v548 = vld [vmem:[%s538 + $0x48] sm:$0xff]
    %v549 = vld [vmem:[%s538 + $0x50] sm:$0xff]
    %v550 = vld [vmem:[%s538 + $0x58] sm:$0xff]
    %v551 = vld [vmem:[%s538 + $0x60] sm:$0xff]
    %v552 = vld [vmem:[%s538 + $0x68] sm:$0xff]
    %v553 = vld [vmem:[%s538 + $0x70] sm:$0xff]
    %v554 = vld [vmem:[%s538 + $0x78] sm:$0xff]
    %v555 = vld [vmem:[%s538 + $0x80] sm:$0xff]
    %v556 = vld [vmem:[%s538 + $0x88] sm:$0xff]
    %v557 = vld [vmem:[%s538 + $0x90] sm:$0xff]
    %v558 = vld [vmem:[%s538 + $0x98] sm:$0xff]
    %v559 = vld [vmem:[%s538 + $0xa0] sm:$0xff]
    %v560 = vld [vmem:[%s538 + $0xa8] sm:$0xff]
    %v561 = vld [vmem:[%s538 + $0xb0] sm:$0xff]
    %v562 = vld [vmem:[%s538 + $0xb8] sm:$0xff]
    %v563 = vld [vmem:[%s538 + $0xc0] sm:$0xff]
    %v564 = vld [vmem:[%s538 + $0xc8] sm:$0xff]
    %v565 = vld [vmem:[%s538 + $0xd0] sm:$0xff]
    %v566 = vld [vmem:[%s538 + $0xd8] sm:$0xff]
    %v567 = vld [vmem:[%s538 + $0xe0] sm:$0xff]
    %v568 = vld [vmem:[%s538 + $0xe8] sm:$0xff]
    %v569 = vld [vmem:[%s538 + $0xf0] sm:$0xff]
    %v570 = vld [vmem:[%s538 + $0xf8] sm:$0xff]
    %571 = vmatprep.subr.mxu0 0.0
    %572 = vmatpush1.msra.mxu0 %v539
    %573 = vmatprep.subr.mxu0 0.0
    %574 = vmatpush1.msra.mxu0 %v540
    %575 = vmatprep.subr.mxu0 0.0
    %576 = vmatpush1.msra.mxu0 %v541
    %577 = vmatprep.subr.mxu0 0.0
    %578 = vmatpush1.msra.mxu0 %v542
    %579 = vmatprep.subr.mxu0 0.0
    %580 = vmatpush1.msra.mxu0 %v543
    %581 = vmatprep.subr.mxu0 0.0
    %582 = vmatpush1.msra.mxu0 %v544
    %583 = vmatprep.subr.mxu0 0.0
    %584 = vmatpush1.msra.mxu0 %v545
    %585 = vmatprep.subr.mxu0 0.0
    %586 = vmatpush1.msra.mxu0 %v546
    %587 = vmatprep.subr.mxu0 0.0
    %588 = vmatpush1.msra.mxu0 %v547
    %589 = vmatprep.subr.mxu0 0.0
    %590 = vmatpush1.msra.mxu0 %v548
    %591 = vmatprep.subr.mxu0 0.0
    %592 = vmatpush1.msra.mxu0 %v549
    %593 = vmatprep.subr.mxu0 0.0
    %594 = vmatpush1.msra.mxu0 %v550
    %595 = vmatprep.subr.mxu0 0.0
    %596 = vmatpush1.msra.mxu0 %v551
    %597 = vmatprep.subr.mxu0 0.0
    %598 = vmatpush1.msra.mxu0 %v552
    %599 = vmatprep.subr.mxu0 0.0
    %600 = vmatpush1.msra.mxu0 %v553
    %601 = vmatprep.subr.mxu0 0.0
    %602 = vmatpush1.msra.mxu0 %v554
    %603 = vmatprep.subr.mxu0 0.0
    %604 = vmatpush1.msra.mxu0 %v555
    %605 = vmatprep.subr.mxu0 0.0
    %606 = vmatpush1.msra.mxu0 %v556
    %607 = vmatprep.subr.mxu0 0.0
    %608 = vmatpush1.msra.mxu0 %v557
    %609 = vmatprep.subr.mxu0 0.0
    %610 = vmatpush1.msra.mxu0 %v558
    %611 = vmatprep.subr.mxu0 0.0
    %612 = vmatpush1.msra.mxu0 %v559
    %613 = vmatprep.subr.mxu0 0.0
    %614 = vmatpush1.msra.mxu0 %v560
    %615 = vmatprep.subr.mxu0 0.0
    %616 = vmatpush1.msra.mxu0 %v561
    %617 = vmatprep.subr.mxu0 0.0
    %618 = vmatpush1.msra.mxu0 %v562
    %619 = vmatprep.subr.mxu0 0.0
    %620 = vmatpush1.msra.mxu0 %v563
    %621 = vmatprep.subr.mxu0 0.0
    %622 = vmatpush1.msra.mxu0 %v564
    %623 = vmatprep.subr.mxu0 0.0
    %624 = vmatpush1.msra.mxu0 %v565
    %625 = vmatprep.subr.mxu0 0.0
    %626 = vmatpush1.msra.mxu0 %v566
    %627 = vmatprep.subr.mxu0 0.0
    %628 = vmatpush1.msra.mxu0 %v567
    %629 = vmatprep.subr.mxu0 0.0
    %630 = vmatpush1.msra.mxu0 %v568
    %631 = vmatprep.subr.mxu0 0.0
    %632 = vmatpush1.msra.mxu0 %v569
    %633 = vmatprep.subr.mxu0 0.0
    %634 = vmatpush1.msra.mxu0 %v570
    %635 = vmatprep.mubr.f32.mxu0 %v314
    %636 = vmatmul.mubr.f32.gmra.mrb[0].mxu0 %v313
    %v637 = vpop.f32.mrb[0].mxu0
    %v638 = vadd.f32 0.0, %v637
    %v639 = vpop.f32.mrb[0].mxu0
    %640 = vmatprep.mubr.f32.mxu0 %v316
    %641 = vmatmul.mubr.f32.gmra.mrb[0].mxu0 %v315
    %v642 = vpop.f32.mrb[0].mxu0
    %v643 = vadd.f32 0.0, %v642
    %v644 = vpop.f32.mrb[0].mxu0
    %645 = vmatprep.mubr.f32.mxu0 %v318
    %646 = vmatmul.mubr.f32.gmra.mrb[0].mxu0 %v317
    %v647 = vpop.f32.mrb[0].mxu0
    %v648 = vadd.f32 0.0, %v647
    %v649 = vpop.f32.mrb[0].mxu0
    %650 = vmatprep.mubr.f32.mxu0 %v320
    %651 = vmatmul.mubr.f32.gmra.mrb[0].mxu0 %v319
    %v652 = vpop.f32.mrb[0].mxu0
    %v653 = vadd.f32 0.0, %v652
    %v654 = vpop.f32.mrb[0].mxu0
    %655 = vmatprep.mubr.f32.mxu0 %v322
    %656 = vmatmul.mubr.f32.gmra.mrb[0].mxu0 %v321
    %v657 = vpop.f32.mrb[0].mxu0
    %v658 = vadd.f32 0.0, %v657
    %v659 = vpop.f32.mrb[0].mxu0
    %660 = vmatprep.mubr.f32.mxu0 %v324
    %661 = vmatmul.mubr.f32.gmra.mrb[0].mxu0 %v323
    %v662 = vpop.f32.mrb[0].mxu0
    %v663 = vadd.f32 0.0, %v662
    %v664 = vpop.f32.mrb[0].mxu0
    %665 = vmatprep.mubr.f32.mxu0 %v326
    %666 = vmatmul.mubr.f32.gmra.mrb[0].mxu0 %v325
    %v667 = vpop.f32.mrb[0].mxu0
    %v668 = vadd.f32 0.0, %v667
    %v669 = vpop.f32.mrb[0].mxu0
    %670 = vmatprep.mubr.f32.mxu0 %v328
    %671 = vmatmul.mubr.f32.gmra.mrb[0].mxu0 %v327
    %v672 = vpop.f32.mrb[0].mxu0
    %v673 = vadd.f32 0.0, %v672
    %v674 = vpop.f32.mrb[0].mxu0
    %675 = vmatprep.mubr.f32.mxu0 %v330
    %676 = vmatmul.mubr.f32.gmra.mrb[0].mxu0 %v329
    %v677 = vpop.f32.mrb[0].mxu0
    %v678 = vadd.f32 0.0, %v677
    %v679 = vpop.f32.mrb[0].mxu0
    %680 = vmatprep.mubr.f32.mxu0 %v332
    %681 = vmatmul.mubr.f32.gmra.mrb[0].mxu0 %v331
    %v682 = vpop.f32.mrb[0].mxu0
    %v683 = vadd.f32 0.0, %v682
    %v684 = vpop.f32.mrb[0].mxu0
    %685 = vmatprep.mubr.f32.mxu0 %v334
    %686 = vmatmul.mubr.f32.gmra.mrb[0].mxu0 %v333
    %v687 = vpop.f32.mrb[0].mxu0
    %v688 = vadd.f32 0.0, %v687
    %v689 = vpop.f32.mrb[0].mxu0
    %690 = vmatprep.mubr.f32.mxu0 %v336
    %691 = vmatmul.mubr.f32.gmra.mrb[0].mxu0 %v335
    %v692 = vpop.f32.mrb[0].mxu0
    %v693 = vadd.f32 0.0, %v692
    %v694 = vpop.f32.mrb[0].mxu0
    %695 = vmatprep.mubr.f32.mxu0 %v338
    %696 = vmatmul.mubr.f32.gmra.mrb[0].mxu0 %v337
    %v697 = vpop.f32.mrb[0].mxu0
    %v698 = vadd.f32 0.0, %v697
    %v699 = vpop.f32.mrb[0].mxu0
    %700 = vmatprep.mubr.f32.mxu0 %v340
    %701 = vmatmul.mubr.f32.gmra.mrb[0].mxu0 %v339
    %v702 = vpop.f32.mrb[0].mxu0
    %v703 = vadd.f32 0.0, %v702
    %v704 = vpop.f32.mrb[0].mxu0
    %705 = vmatprep.mubr.f32.mxu0 %v342
    %706 = vmatmul.mubr.f32.gmra.mrb[0].mxu0 %v341
    %v707 = vpop.f32.mrb[0].mxu0
    %v708 = vadd.f32 0.0, %v707
    %v709 = vpop.f32.mrb[0].mxu0
    %710 = vmatprep.mubr.f32.mxu0 %v344
    %711 = vmatmul.mubr.f32.gmra.mrb[0].mxu0 %v343
    %v712 = vpop.f32.mrb[0].mxu0
    %v713 = vadd.f32 0.0, %v712
    %v714 = vpop.f32.mrb[0].mxu0
    %715 = vdwg.mxu0
    %716 = vmatprep.subr.mxu0 0.0
    %717 = vmatpush1.msra.mxu0 %v638
    %718 = vmatprep.subr.mxu0 0.0
    %719 = vmatpush1.msra.mxu0 %v643
    %720 = vmatprep.subr.mxu0 0.0
    %721 = vmatpush1.msra.mxu0 %v648
    %722 = vmatprep.subr.mxu0 0.0
    %723 = vmatpush1.msra.mxu0 %v653
    %724 = vmatprep.subr.mxu0 0.0
    %725 = vmatpush1.msra.mxu0 %v658
    %726 = vmatprep.subr.mxu0 0.0
    %727 = vmatpush1.msra.mxu0 %v663
    %728 = vmatprep.subr.mxu0 0.0
    %729 = vmatpush1.msra.mxu0 %v668
    %730 = vmatprep.subr.mxu0 0.0
    %731 = vmatpush1.msra.mxu0 %v673
    %732 = vmatprep.subr.mxu0 0.0
    %733 = vmatpush1.msra.mxu0 %v678
    %734 = vmatprep.subr.mxu0 0.0
    %735 = vmatpush1.msra.mxu0 %v683
    %736 = vmatprep.subr.mxu0 0.0
    %737 = vmatpush1.msra.mxu0 %v688
    %738 = vmatprep.subr.mxu0 0.0
    %739 = vmatpush1.msra.mxu0 %v693
    %740 = vmatprep.subr.mxu0 0.0
    %741 = vmatpush1.msra.mxu0 %v698
    %742 = vmatprep.subr.mxu0 0.0
    %743 = vmatpush1.msra.mxu0 %v703
    %744 = vmatprep.subr.mxu0 0.0
    %745 = vmatpush1.msra.mxu0 %v708
    %746 = vmatprep.subr.mxu0 0.0
    %747 = vmatpush1.msra.mxu0 %v713
    %748 = vmatprep.subr.mxu0 0.0
    %749 = vmatpush1.msra.mxu0 0.0
    %750 = vmatprep.subr.mxu0 0.0
    %751 = vmatpush1.msra.mxu0 0.0
    %752 = vmatprep.subr.mxu0 0.0
    %753 = vmatpush1.msra.mxu0 0.0
    %754 = vmatprep.subr.mxu0 0.0
    %755 = vmatpush1.msra.mxu0 0.0
    %756 = vmatprep.subr.mxu0 0.0
    %757 = vmatpush1.msra.mxu0 0.0
    %758 = vmatprep.subr.mxu0 0.0
    %759 = vmatpush1.msra.mxu0 0.0
    %760 = vmatprep.subr.mxu0 0.0
    %761 = vmatpush1.msra.mxu0 0.0
    %762 = vmatprep.subr.mxu0 0.0
    %763 = vmatpush1.msra.mxu0 0.0
    %764 = vmatprep.subr.mxu0 0.0
    %765 = vmatpush1.msra.mxu0 0.0
    %766 = vmatprep.subr.mxu0 0.0
    %767 = vmatpush1.msra.mxu0 0.0
    %768 = vmatprep.subr.mxu0 0.0
    %769 = vmatpush1.msra.mxu0 0.0
    %770 = vmatprep.subr.mxu0 0.0
    %771 = vmatpush1.msra.mxu0 0.0
    %772 = vmatprep.subr.mxu0 0.0
    %773 = vmatpush1.msra.mxu0 0.0
    %774 = vmatprep.subr.mxu0 0.0
    %775 = vmatpush1.msra.mxu0 0.0
    %776 = vmatprep.subr.mxu0 0.0
    %777 = vmatpush1.msra.mxu0 0.0
    %778 = vmatprep.subr.mxu0 0.0
    %779 = vmatpush1.msra.mxu0 0.0
    %780 = vmatprep.mubr.f32.mxu0 0.0
    %781 = vmatmul.mubr.f32.gmra.mrb[0].mxu0 %v57
    %v782 = vpop.f32.mrb[0].mxu0
    %v783 = vadd.f32 0.0, %v782
    %v784 = vpop.f32.mrb[0].mxu0
    %785 = vmatprep.mubr.f32.mxu0 0.0
    %786 = vmatmul.mubr.f32.gmra.mrb[0].mxu0 %v59
    %v787 = vpop.f32.mrb[0].mxu0
    %v788 = vadd.f32 0.0, %v787
    %v789 = vpop.f32.mrb[0].mxu0
    %790 = vmatprep.mubr.f32.mxu0 0.0
    %791 = vmatmul.mubr.f32.gmra.mrb[0].mxu0 %v61
    %v792 = vpop.f32.mrb[0].mxu0
    %v793 = vadd.f32 0.0, %v792
    %v794 = vpop.f32.mrb[0].mxu0
    %795 = vmatprep.mubr.f32.mxu0 0.0
    %796 = vmatmul.mubr.f32.gmra.mrb[0].mxu0 %v63
    %v797 = vpop.f32.mrb[0].mxu0
    %v798 = vadd.f32 0.0, %v797
    %v799 = vpop.f32.mrb[0].mxu0
    %800 = vmatprep.mubr.f32.mxu0 0.0
    %801 = vmatmul.mubr.f32.gmra.mrb[0].mxu0 %v65
    %v802 = vpop.f32.mrb[0].mxu0
    %v803 = vadd.f32 0.0, %v802
    %v804 = vpop.f32.mrb[0].mxu0
    %805 = vmatprep.mubr.f32.mxu0 0.0
    %806 = vmatmul.mubr.f32.gmra.mrb[0].mxu0 %v67
    %v807 = vpop.f32.mrb[0].mxu0
    %v808 = vadd.f32 0.0, %v807
    %v809 = vpop.f32.mrb[0].mxu0
    %810 = vmatprep.mubr.f32.mxu0 0.0
    %811 = vmatmul.mubr.f32.gmra.mrb[0].mxu0 %v69
    %v812 = vpop.f32.mrb[0].mxu0
    %v813 = vadd.f32 0.0, %v812
    %v814 = vpop.f32.mrb[0].mxu0
    %815 = vmatprep.mubr.f32.mxu0 0.0
    %816 = vmatmul.mubr.f32.gmra.mrb[0].mxu0 %v71
    %v817 = vpop.f32.mrb[0].mxu0
    %v818 = vadd.f32 0.0, %v817
    %v819 = vpop.f32.mrb[0].mxu0
    %820 = vmatprep.mubr.f32.mxu0 0.0
    %821 = vmatmul.mubr.f32.gmra.mrb[0].mxu0 %v73
    %v822 = vpop.f32.mrb[0].mxu0
    %v823 = vadd.f32 0.0, %v822
    %v824 = vpop.f32.mrb[0].mxu0
    %825 = vmatprep.mubr.f32.mxu0 0.0
    %826 = vmatmul.mubr.f32.gmra.mrb[0].mxu0 %v75
    %v827 = vpop.f32.mrb[0].mxu0
    %v828 = vadd.f32 0.0, %v827
    %v829 = vpop.f32.mrb[0].mxu0
    %830 = vmatprep.mubr.f32.mxu0 0.0
    %831 = vmatmul.mubr.f32.gmra.mrb[0].mxu0 %v77
    %v832 = vpop.f32.mrb[0].mxu0
    %v833 = vadd.f32 0.0, %v832
    %v834 = vpop.f32.mrb[0].mxu0
    %835 = vmatprep.mubr.f32.mxu0 0.0
    %836 = vmatmul.mubr.f32.gmra.mrb[0].mxu0 %v79
    %v837 = vpop.f32.mrb[0].mxu0
    %v838 = vadd.f32 0.0, %v837
    %v839 = vpop.f32.mrb[0].mxu0
    %840 = vmatprep.mubr.f32.mxu0 0.0
    %841 = vmatmul.mubr.f32.gmra.mrb[0].mxu0 %v81
    %v842 = vpop.f32.mrb[0].mxu0
    %v843 = vadd.f32 0.0, %v842
    %v844 = vpop.f32.mrb[0].mxu0
    %845 = vmatprep.mubr.f32.mxu0 0.0
    %846 = vmatmul.mubr.f32.gmra.mrb[0].mxu0 %v83
    %v847 = vpop.f32.mrb[0].mxu0
    %v848 = vadd.f32 0.0, %v847
    %v849 = vpop.f32.mrb[0].mxu0
    %850 = vmatprep.mubr.f32.mxu0 0.0
    %851 = vmatmul.mubr.f32.gmra.mrb[0].mxu0 %v85
    %v852 = vpop.f32.mrb[0].mxu0
    %v853 = vadd.f32 0.0, %v852
    %v854 = vpop.f32.mrb[0].mxu0
    %855 = vmatprep.mubr.f32.mxu0 0.0
    %856 = vmatmul.mubr.f32.gmra.mrb[0].mxu0 %v87
    %v857 = vpop.f32.mrb[0].mxu0
    %v858 = vadd.f32 0.0, %v857
    %v859 = vpop.f32.mrb[0].mxu0
    %860 = vdwg.mxu0
    %861 = vmatprep.subr.mxu0 0.0
    %862 = vmatpush1.msra.mxu0 %v444
    %863 = vmatprep.subr.mxu0 0.0
    %864 = vmatpush1.msra.mxu0 %v449
    %865 = vmatprep.subr.mxu0 0.0
    %866 = vmatpush1.msra.mxu0 %v454
    %867 = vmatprep.subr.mxu0 0.0
    %868 = vmatpush1.msra.mxu0 %v459
    %869 = vmatprep.subr.mxu0 0.0
    %870 = vmatpush1.msra.mxu0 %v464
    %871 = vmatprep.subr.mxu0 0.0
    %872 = vmatpush1.msra.mxu0 %v469
    %873 = vmatprep.subr.mxu0 0.0
    %874 = vmatpush1.msra.mxu0 %v474
    %875 = vmatprep.subr.mxu0 0.0
    %876 = vmatpush1.msra.mxu0 %v479
    %877 = vmatprep.subr.mxu0 0.0
    %878 = vmatpush1.msra.mxu0 %v484
    %879 = vmatprep.subr.mxu0 0.0
    %880 = vmatpush1.msra.mxu0 %v489
    %881 = vmatprep.subr.mxu0 0.0
    %882 = vmatpush1.msra.mxu0 %v494
    %883 = vmatprep.subr.mxu0 0.0
    %884 = vmatpush1.msra.mxu0 %v499
    %885 = vmatprep.subr.mxu0 0.0
    %886 = vmatpush1.msra.mxu0 %v504
    %887 = vmatprep.subr.mxu0 0.0
    %888 = vmatpush1.msra.mxu0 %v509
    %889 = vmatprep.subr.mxu0 0.0
    %890 = vmatpush1.msra.mxu0 %v514
    %891 = vmatprep.subr.mxu0 0.0
    %892 = vmatpush1.msra.mxu0 %v519
    %893 = vmatprep.subr.mxu0 0.0
    %894 = vmatpush1.msra.mxu0 0.0
    %895 = vmatprep.subr.mxu0 0.0
    %896 = vmatpush1.msra.mxu0 0.0
    %897 = vmatprep.subr.mxu0 0.0
    %898 = vmatpush1.msra.mxu0 0.0
    %899 = vmatprep.subr.mxu0 0.0
    %900 = vmatpush1.msra.mxu0 0.0
    %901 = vmatprep.subr.mxu0 0.0
    %902 = vmatpush1.msra.mxu0 0.0
    %903 = vmatprep.subr.mxu0 0.0
    %904 = vmatpush1.msra.mxu0 0.0
    %905 = vmatprep.subr.mxu0 0.0
    %906 = vmatpush1.msra.mxu0 0.0
    %907 = vmatprep.subr.mxu0 0.0
    %908 = vmatpush1.msra.mxu0 0.0
    %909 = vmatprep.subr.mxu0 0.0
    %910 = vmatpush1.msra.mxu0 0.0
    %911 = vmatprep.subr.mxu0 0.0
    %912 = vmatpush1.msra.mxu0 0.0
    %913 = vmatprep.subr.mxu0 0.0
    %914 = vmatpush1.msra.mxu0 0.0
    %915 = vmatprep.subr.mxu0 0.0
    %916 = vmatpush1.msra.mxu0 0.0
    %917 = vmatprep.subr.mxu0 0.0
    %918 = vmatpush1.msra.mxu0 0.0
    %919 = vmatprep.subr.mxu0 0.0
    %920 = vmatpush1.msra.mxu0 0.0
    %921 = vmatprep.subr.mxu0 0.0
    %922 = vmatpush1.msra.mxu0 0.0
    %923 = vmatprep.subr.mxu0 0.0
    %924 = vmatpush1.msra.mxu0 0.0
    %925 = vmatprep.mubr.f32.mxu0 0.0
    %926 = vmatmul.mubr.f32.gmra.mrb[0].mxu0 %v522
    %v927 = vpop.f32.mrb[0].mxu0
    %v928 = vadd.f32 %v783, %v927
    %v929 = vpop.f32.mrb[0].mxu0
    %930 = vmatprep.mubr.f32.mxu0 0.0
    %931 = vmatmul.mubr.f32.gmra.mrb[0].mxu0 %v523
    %v932 = vpop.f32.mrb[0].mxu0
    %v933 = vadd.f32 %v788, %v932
    %v934 = vpop.f32.mrb[0].mxu0
    %935 = vmatprep.mubr.f32.mxu0 0.0
    %936 = vmatmul.mubr.f32.gmra.mrb[0].mxu0 %v524
    %v937 = vpop.f32.mrb[0].mxu0
    %v938 = vadd.f32 %v793, %v937
    %v939 = vpop.f32.mrb[0].mxu0
    %940 = vmatprep.mubr.f32.mxu0 0.0
    %941 = vmatmul.mubr.f32.gmra.mrb[0].mxu0 %v525
    %v942 = vpop.f32.mrb[0].mxu0
    %v943 = vadd.f32 %v798, %v942
    %v944 = vpop.f32.mrb[0].mxu0
    %945 = vmatprep.mubr.f32.mxu0 0.0
    %946 = vmatmul.mubr.f32.gmra.mrb[0].mxu0 %v526
    %v947 = vpop.f32.mrb[0].mxu0
    %v948 = vadd.f32 %v803, %v947
    %v949 = vpop.f32.mrb[0].mxu0
    %950 = vmatprep.mubr.f32.mxu0 0.0
    %951 = vmatmul.mubr.f32.gmra.mrb[0].mxu0 %v527
    %v952 = vpop.f32.mrb[0].mxu0
    %v953 = vadd.f32 %v808, %v952
    %v954 = vpop.f32.mrb[0].mxu0
    %955 = vmatprep.mubr.f32.mxu0 0.0
    %956 = vmatmul.mubr.f32.gmra.mrb[0].mxu0 %v528
    %v957 = vpop.f32.mrb[0].mxu0
    %v958 = vadd.f32 %v813, %v957
    %v959 = vpop.f32.mrb[0].mxu0
    %960 = vmatprep.mubr.f32.mxu0 0.0
    %961 = vmatmul.mubr.f32.gmra.mrb[0].mxu0 %v529
    %v962 = vpop.f32.mrb[0].mxu0
    %v963 = vadd.f32 %v818, %v962
    %v964 = vpop.f32.mrb[0].mxu0
    %965 = vmatprep.mubr.f32.mxu0 0.0
    %966 = vmatmul.mubr.f32.gmra.mrb[0].mxu0 %v530
    %v967 = vpop.f32.mrb[0].mxu0
    %v968 = vadd.f32 %v823, %v967
    %v969 = vpop.f32.mrb[0].mxu0
    %970 = vmatprep.mubr.f32.mxu0 0.0
    %971 = vmatmul.mubr.f32.gmra.mrb[0].mxu0 %v531
    %v972 = vpop.f32.mrb[0].mxu0
    %v973 = vadd.f32 %v828, %v972
    %v974 = vpop.f32.mrb[0].mxu0
    %975 = vmatprep.mubr.f32.mxu0 0.0
    %976 = vmatmul.mubr.f32.gmra.mrb[0].mxu0 %v532
    %v977 = vpop.f32.mrb[0].mxu0
    %v978 = vadd.f32 %v833, %v977
    %v979 = vpop.f32.mrb[0].mxu0
    %980 = vmatprep.mubr.f32.mxu0 0.0
    %981 = vmatmul.mubr.f32.gmra.mrb[0].mxu0 %v533
    %v982 = vpop.f32.mrb[0].mxu0
    %v983 = vadd.f32 %v838, %v982
    %v984 = vpop.f32.mrb[0].mxu0
    %985 = vmatprep.mubr.f32.mxu0 0.0
    %986 = vmatmul.mubr.f32.gmra.mrb[0].mxu0 %v534
    %v987 = vpop.f32.mrb[0].mxu0
    %v988 = vadd.f32 %v843, %v987
    %v989 = vpop.f32.mrb[0].mxu0
    %990 = vmatprep.mubr.f32.mxu0 0.0
    %991 = vmatmul.mubr.f32.gmra.mrb[0].mxu0 %v535
    %v992 = vpop.f32.mrb[0].mxu0
    %v993 = vadd.f32 %v848, %v992
    %v994 = vpop.f32.mrb[0].mxu0
    %995 = vmatprep.mubr.f32.mxu0 0.0
    %996 = vmatmul.mubr.f32.gmra.mrb[0].mxu0 %v536
    %v997 = vpop.f32.mrb[0].mxu0
    %v998 = vadd.f32 %v853, %v997
    %v999 = vpop.f32.mrb[0].mxu0
    %1000 = vmatprep.mubr.f32.mxu0 0.0
    %1001 = vmatmul.mubr.f32.gmra.mrb[0].mxu0 %v537
    %v1002 = vpop.f32.mrb[0].mxu0
    %v1003 = vadd.f32 %v858, %v1002
    %v1004 = vpop.f32.mrb[0].mxu0
    %1005 = vdwg.mxu0
    %1006 = vst [vmem:[#allocation8] sm:$0xff] %v928
    %1007 = vst [vmem:[#allocation8 + $0x8] sm:$0xff] %v933
    %1008 = vst [vmem:[#allocation8 + $0x10] sm:$0xff] %v938
    %1009 = vst [vmem:[#allocation8 + $0x18] sm:$0xff] %v943
    %1010 = vst [vmem:[#allocation8 + $0x20] sm:$0xff] %v948
    %1011 = vst [vmem:[#allocation8 + $0x28] sm:$0xff] %v953
    %1012 = vst [vmem:[#allocation8 + $0x30] sm:$0xff] %v958
    %1013 = vst [vmem:[#allocation8 + $0x38] sm:$0xff] %v963
    %1014 = vst [vmem:[#allocation8 + $0x40] sm:$0xff] %v968
    %1015 = vst [vmem:[#allocation8 + $0x48] sm:$0xff] %v973
    %1016 = vst [vmem:[#allocation8 + $0x50] sm:$0xff] %v978
    %1017 = vst [vmem:[#allocation8 + $0x58] sm:$0xff] %v983
    %1018 = vst [vmem:[#allocation8 + $0x60] sm:$0xff] %v988
    %1019 = vst [vmem:[#allocation8 + $0x68] sm:$0xff] %v993
    %1020 = vst [vmem:[#allocation8 + $0x70] sm:$0xff] %v998
    %1021 = vst [vmem:[#allocation8 + $0x78] sm:$0xff] %v1003
    // Predicated region
    $region26: #{tpu_custom_call.1} parent=1 // pred_check
      _
    $region27: #{tpu_custom_call.1} parent=1 // pred_check_branch
      %1023 = sbr.rel (0) target = $region29
    $region28: #{tpu_custom_call.1} parent=1 // pred_region
      %s1025 = ssub.s32 2048, 2048
      %1026 = vsyncadd [#allocation4], %s1025
      %s1027 = sshll.u32 [#allocation8], 4
      %s1028 = int_to_ptr.vmem [resolvable:$true] %s1027
      %1033 = dma.vmem_to_hbm [thread:$0]  %s1028, 2048, %s3, [#allocation4], 128, 128, 8
    $region29: #{tpu_custom_call.1} parent=1 // pred_fallthru
      _
    // Predicated region
    $region30: #{tpu_custom_call.1} parent=1 // pred_check
      _
    $region31: #{tpu_custom_call.1} parent=1 // pred_check_branch
      %1035 = sbr.rel (0) target = $region33
    $region32: #{tpu_custom_call.1} parent=1 // pred_region
      %1036 = dma.done [#allocation4], 2048
    $region33: #{tpu_custom_call.1} parent=1 // pred_fallthru
      _
    %1037 = vsyncpa [#allocation3], 1
    %1038 = vsyncpa [#allocation6], 1
    %1039 = vsyncpa [#allocation4], 1

</llo_original>
